<compile_context>
chip_gen: v6e
topology: v6e:2x2x1
jax: 0.10.0
libtpu: 0.0.40
codegen_flags: <defaults>
</compile_context>

<pallas_src>
import functools

import jax
import jax.numpy as jnp
from jax.experimental import pallas as pl
from jax.experimental.pallas import tpu as pltpu

_SUBLANE = 8  # f32 sublane alignment for tiled (non-full) batch blocks


def _round_up(x, m):
    return ((x + m - 1) // m) * m


def _decoder_kernel(z_ref, w1_ref, b1_ref, w2_ref, b2_ref, o_ref, *, use_sigmoid):
    # Linear 1 + ReLU: MXU matmul with f32 accumulation, VPU bias/relu.
    h = jnp.dot(z_ref[...], w1_ref[...], preferred_element_type=jnp.float32)
    h = jnp.maximum(h + b1_ref[...], 0.0)           # (Bt, H) + (1, H) broadcast
    # Linear 2 (+ optional sigmoid; sigmoid uses the EUP slot).
    out = jnp.dot(h, w2_ref[...], preferred_element_type=jnp.float32)
    out = out + b2_ref[...]
    if use_sigmoid:
        out = jax.nn.sigmoid(out)
    o_ref[...] = out.astype(o_ref.dtype)


def reference_forward(z, w1, b1, w2, b2, use_sigmoid=False):
    h = jnp.maximum(z @ w1 + jnp.reshape(b1, (1, -1)), 0.0)
    out = h @ w2 + jnp.reshape(b2, (1, -1))
    if use_sigmoid:
        out = jax.nn.sigmoid(out)
    return out


def decoder_forward(z, w1, b1, w2, b2, *, use_sigmoid=False,
                    max_batch_tile=4096, xla_fallback_max_batch=0):
    """z: (B, latent); w1: (latent, hidden); w2: (hidden, output);
    b1/b2: (hidden,)/(output,) (or (1, H)/(1, O)).
    Weights are pre-transposed from PyTorch's (out, in) nn.Linear layout."""
    B, latent_dim = z.shape
    hidden_dim = w1.shape[1]
    output_dim = w2.shape[1]

    # Optional fast path: for tiny batches fused XLA matches/beats the kernel
    # (dispatch overhead dominates).  Disabled by default (threshold 0).
    if B <= xla_fallback_max_batch:
        return reference_forward(z, w1, b1, w2, b2, use_sigmoid)

    dtype = z.dtype
    w1 = w1.astype(dtype)
    w2 = w2.astype(dtype)
    b1 = jnp.reshape(b1, (1, hidden_dim)).astype(dtype)
    b2 = jnp.reshape(b2, (1, output_dim)).astype(dtype)

    if B <= max_batch_tile:
        # Single grid step; blocks equal the full arrays -> no padding at all,
        # arbitrary B (need not be a multiple of 8).
        num_tiles = 1
        batch_tile = B
        Bp = B
        zp = z
    else:
        # Multi-tile path: even tile count so both v7x TensorCores get work
        # on the "parallel" batch axis (harmless on v5e/v6e).
        num_tiles = -(-B // max_batch_tile)
        if num_tiles % 2:
            num_tiles += 1
        batch_tile = _round_up(-(-B // num_tiles), _SUBLANE)
        Bp = batch_tile * num_tiles
        zp = jnp.pad(z, ((0, Bp - B), (0, 0)))

    kernel = functools.partial(_decoder_kernel, use_sigmoid=use_sigmoid)

    out_p = pl.pallas_call(
        kernel,
        out_shape=jax.ShapeDtypeStruct((Bp, output_dim), dtype),
        grid_spec=pl.GridSpec(
            grid=(num_tiles,),
            in_specs=[
                pl.BlockSpec((batch_tile, latent_dim), lambda i: (i, 0)),
                pl.BlockSpec((latent_dim, hidden_dim), lambda i: (0, 0)),
                pl.BlockSpec((1, hidden_dim), lambda i: (0, 0)),
                pl.BlockSpec((hidden_dim, output_dim), lambda i: (0, 0)),
                pl.BlockSpec((1, output_dim), lambda i: (0, 0)),
            ],
            out_specs=pl.BlockSpec((batch_tile, output_dim), lambda i: (i, 0)),
        ),
        compiler_params=pltpu.CompilerParams(
            dimension_semantics=("parallel",),
            vmem_limit_bytes=32 * 1024 * 1024,  # explicit, safe on v5e/v6e/v7x
        ),
    )(zp, w1, b1, w2, b2)

    # Strip batch padding only when it exists (avoids a copy in the common case).
    return out_p if Bp == B else out_p[:B]


if __name__ == "__main__":
    latent_dim = 10
    hidden_dim = 50
    output_dim = 64
    use_sigmoid = True

    key = jax.random.PRNGKey(0)
    kz, k1, k2, k3, k4, kz2, kz3 = jax.random.split(key, 7)

    # Parameters match nn.Linear weights, pre-transposed to (in, out).
    w1 = jax.random.normal(k1, (latent_dim, hidden_dim), dtype=jnp.float32) * 0.1
    b1 = jax.random.normal(k2, (hidden_dim,), dtype=jnp.float32) * 0.1
    w2 = jax.random.normal(k3, (hidden_dim, output_dim), dtype=jnp.float32) * 0.1
    b2 = jax.random.normal(k4, (output_dim,), dtype=jnp.float32) * 0.1

    # Case 1: B = 64 (original test) -> single step, zero padding anywhere.
    z = jax.random.normal(kz, (64, latent_dim), dtype=jnp.float32)
    out = jax.block_until_ready(
        decoder_forward(z, w1, b1, w2, b2, use_sigmoid=use_sigmoid))
    ref = reference_forward(z, w1, b1, w2, b2, use_sigmoid=use_sigmoid)
    assert out.shape == (64, output_dim)
    assert jnp.allclose(out, ref, atol=1e-5, rtol=1e-5)

    # Case 2: batch not a multiple of 8 -> still single step, no padding
    # (block == full array dims).
    z2 = jax.random.normal(kz2, (37, latent_dim), dtype=jnp.float32)
    out2 = jax.block_until_ready(
        decoder_forward(z2, w1, b1, w2, b2, use_sigmoid=use_sigmoid))
    ref2 = reference_forward(z2, w1, b1, w2, b2, use_sigmoid=use_sigmoid)
    assert out2.shape == (37, output_dim)
    assert jnp.allclose(out2, ref2, atol=1e-5, rtol=1e-5)

    # Case 3: large batch -> multi-tile path (even tile count, batch padding).
    z3 = jax.random.normal(kz3, (4100, latent_dim), dtype=jnp.float32)
    out3 = jax.block_until_ready(
        decoder_forward(z3, w1, b1, w2, b2, use_sigmoid=use_sigmoid,
                        max_batch_tile=1024))
    ref3 = reference_forward(z3, w1, b1, w2, b2, use_sigmoid=use_sigmoid)
    assert out3.shape == (4100, output_dim)
    assert jnp.allclose(out3, ref3, atol=1e-5, rtol=1e-5)

    print("KERNEL_OK")
</pallas_src>

<mosaic_0001>
module attributes {stable_mosaic.version = 11 : i64} {
  func.func @_decoder_kernel(%arg0: i32, %arg1: memref<64x10xf32, #tpu.memory_space<vmem>>, %arg2: memref<10x50xf32, #tpu.memory_space<vmem>>, %arg3: memref<1x50xf32, #tpu.memory_space<vmem>>, %arg4: memref<50x64xf32, #tpu.memory_space<vmem>>, %arg5: memref<1x64xf32, #tpu.memory_space<vmem>>, %arg6: memref<64x64xf32, #tpu.memory_space<vmem>>) attributes {dimension_semantics = [#tpu.dimension_semantics<parallel>], iteration_bounds = array<i64: 1>, scalar_prefetch = 0 : i64, scratch_operands = 0 : i64, tpu.core_type = #tpu.core_type<tc>, window_params = [{transform_indices = @transform_0, window_bounds = array<i64: 64, 10>}, {pipeline_mode = #tpu.pipeline_mode<synchronous>, transform_indices = @transform_1, window_bounds = array<i64: 10, 50>}, {pipeline_mode = #tpu.pipeline_mode<synchronous>, transform_indices = @transform_2, window_bounds = array<i64: 1, 50>}, {pipeline_mode = #tpu.pipeline_mode<synchronous>, transform_indices = @transform_3, window_bounds = array<i64: 50, 64>}, {pipeline_mode = #tpu.pipeline_mode<synchronous>, transform_indices = @transform_4, window_bounds = array<i64: 1, 64>}, {transform_indices = @transform_5, window_bounds = array<i64: 64, 64>}]} {
    %c0 = arith.constant 0 : index
    %c0_0 = arith.constant 0 : index
    %0 = vector.load %arg1[%c0, %c0_0] : memref<64x10xf32, #tpu.memory_space<vmem>>, vector<64x10xf32>
    %c0_1 = arith.constant 0 : index
    %c0_2 = arith.constant 0 : index
    %1 = vector.load %arg2[%c0_1, %c0_2] : memref<10x50xf32, #tpu.memory_space<vmem>>, vector<10x50xf32>
    %cst = arith.constant dense<0.000000e+00> : vector<64x50xf32>
    %2 = tpu.matmul %0, %1, %cst {dimension_numbers = #tpu.dot_dimension_numbers<[1], [0], [0], [1], [0, 0, 1, 1], [], []>} : vector<64x10xf32>, vector<10x50xf32>, vector<64x50xf32> -> vector<64x50xf32>
    %c0_3 = arith.constant 0 : index
    %c0_4 = arith.constant 0 : index
    %3 = vector.load %arg3[%c0_3, %c0_4] : memref<1x50xf32, #tpu.memory_space<vmem>>, vector<1x50xf32>
    %4 = vector.broadcast %3 : vector<1x50xf32> to vector<64x50xf32>
    %5 = arith.addf %2, %4 : vector<64x50xf32>
    %cst_5 = arith.constant 0.000000e+00 : f32
    %6 = vector.broadcast %cst_5 : f32 to vector<64x50xf32>
    %7 = arith.maximumf %5, %6 : vector<64x50xf32>
    %c0_6 = arith.constant 0 : index
    %c0_7 = arith.constant 0 : index
    %8 = vector.load %arg4[%c0_6, %c0_7] : memref<50x64xf32, #tpu.memory_space<vmem>>, vector<50x64xf32>
    %cst_8 = arith.constant dense<0.000000e+00> : vector<64x64xf32>
    %9 = tpu.matmul %7, %8, %cst_8 {dimension_numbers = #tpu.dot_dimension_numbers<[1], [0], [0], [1], [0, 0, 1, 1], [], []>} : vector<64x50xf32>, vector<50x64xf32>, vector<64x64xf32> -> vector<64x64xf32>
    %c0_9 = arith.constant 0 : index
    %c0_10 = arith.constant 0 : index
    %10 = vector.load %arg5[%c0_9, %c0_10] : memref<1x64xf32, #tpu.memory_space<vmem>>, vector<1x64xf32>
    %11 = vector.broadcast %10 : vector<1x64xf32> to vector<64x64xf32>
    %12 = arith.addf %9, %11 : vector<64x64xf32>
    %13 = arith.negf %12 : vector<64x64xf32>
    %14 = math.exp %13 : vector<64x64xf32>
    %cst_11 = arith.constant 1.000000e+00 : f32
    %15 = vector.broadcast %cst_11 : f32 to vector<64x64xf32>
    %16 = arith.addf %15, %14 : vector<64x64xf32>
    %17 = arith.divf %15, %16 : vector<64x64xf32>
    %c0_12 = arith.constant 0 : index
    %c0_13 = arith.constant 0 : index
    %18 = vector.load %arg6[%c0_12, %c0_13] : memref<64x64xf32, #tpu.memory_space<vmem>>, vector<64x64xf32>
    tpu.vector_store %arg6[%c0_12, %c0_13], %17 {strides = array<i32>} : memref<64x64xf32, #tpu.memory_space<vmem>>, vector<64x64xf32>,
    return
  }
  func.func @transform_0(%arg0: i32) -> (i32, i32) {
    %c0_i32 = arith.constant 0 : i32
    %c0_i32_0 = arith.constant 0 : i32
    return %arg0, %c0_i32 : i32, i32
  }
  func.func @transform_1(%arg0: i32) -> (i32, i32) {
    %c0_i32 = arith.constant 0 : i32
    %c0_i32_0 = arith.constant 0 : i32
    %c0_i32_1 = arith.constant 0 : i32
    return %c0_i32, %c0_i32_0 : i32, i32
  }
  func.func @transform_2(%arg0: i32) -> (i32, i32) {
    %c0_i32 = arith.constant 0 : i32
    %c0_i32_0 = arith.constant 0 : i32
    %c0_i32_1 = arith.constant 0 : i32
    return %c0_i32, %c0_i32_0 : i32, i32
  }
  func.func @transform_3(%arg0: i32) -> (i32, i32) {
    %c0_i32 = arith.constant 0 : i32
    %c0_i32_0 = arith.constant 0 : i32
    %c0_i32_1 = arith.constant 0 : i32
    return %c0_i32, %c0_i32_0 : i32, i32
  }
  func.func @transform_4(%arg0: i32) -> (i32, i32) {
    %c0_i32 = arith.constant 0 : i32
    %c0_i32_0 = arith.constant 0 : i32
    %c0_i32_1 = arith.constant 0 : i32
    return %c0_i32, %c0_i32_0 : i32, i32
  }
  func.func @transform_5(%arg0: i32) -> (i32, i32) {
    %c0_i32 = arith.constant 0 : i32
    %c0_i32_0 = arith.constant 0 : i32
    return %arg0, %c0_i32 : i32, i32
  }
}

</mosaic_0001>

<llo_original>
// kernel: tpu_custom_call.1
$region0: #{tpu_custom_call.1}
  #allocation0 [shape = 'u32[]', space=smem, size = 0x4, offset = 0x4, fixed_abs, tag = 'smem constant byte address 0x4 - core index']
  #allocation1 [shape = 'u32[144,128]{1,0:T(1,128)}', space=vmem, size = 0x12000, scoped, tag = 'internal scratch']
  %s0 = inlined_call_operand.vmem [shape: f32[64,10], index: 0, kind: input, shape index: {}]
  %s1 = inlined_call_operand.vmem [shape: f32[10,50], index: 1, kind: input, shape index: {}]
  %s2 = inlined_call_operand.vmem [shape: f32[1,50], index: 2, kind: input, shape index: {}]
  %s3 = inlined_call_operand.vmem [shape: f32[50,64], index: 3, kind: input, shape index: {}]
  %s4 = inlined_call_operand.vmem [shape: f32[1,64], index: 4, kind: input, shape index: {}]
  %s5 = inlined_call_operand.hbm [shape: f32[64,64], index: 5, kind: output, shape index: {}]
  %s6 = sld [smem:[#allocation0]]
  $region30: #{tpu_custom_call.1} parent=0
    _
  %s8 = ssub.s32 1, %s6
  %s9 = scalar_select 0, %s8, %s6
  $region1: #{tpu_custom_call.1} parent=0
    #allocation2 [shape = 'u8[32768]{0}', space=vmem, size = 0x8000, scoped, tag = 'output window, operand 0, single buffered']
    #allocation3 [shape = 's32[1]{0}', space=sflag, size = 0x4, scoped, tag = 'scoped memory for tpu_custom_call.1']
    %10 = vsyncpa [#allocation3], 0
    // Predicated region
    $region2: #{tpu_custom_call.1} parent=1 // pred_check
      _
    $region3: #{tpu_custom_call.1} parent=1 // pred_check_branch
      %12 = sbr.rel (0) target = $region5
    $region4: #{tpu_custom_call.1} parent=1 // pred_region
      _
    $region5: #{tpu_custom_call.1} parent=1 // pred_fallthru
      _
    // Predicated region
    $region6: #{tpu_custom_call.1} parent=1 // pred_check
      _
    $region7: #{tpu_custom_call.1} parent=1 // pred_check_branch
      %14 = sbr.rel (0) target = $region9
    $region8: #{tpu_custom_call.1} parent=1 // pred_region
      _
    $region9: #{tpu_custom_call.1} parent=1 // pred_fallthru
      _
    // Predicated region
    $region10: #{tpu_custom_call.1} parent=1 // pred_check
      _
    $region11: #{tpu_custom_call.1} parent=1 // pred_check_branch
      %16 = sbr.rel (0) target = $region13
    $region12: #{tpu_custom_call.1} parent=1 // pred_region
      _
    $region13: #{tpu_custom_call.1} parent=1 // pred_fallthru
      _
    // Predicated region
    $region14: #{tpu_custom_call.1} parent=1 // pred_check
      _
    $region15: #{tpu_custom_call.1} parent=1 // pred_check_branch
      %18 = sbr.rel (0) target = $region17
    $region16: #{tpu_custom_call.1} parent=1 // pred_region
      _
    $region17: #{tpu_custom_call.1} parent=1 // pred_fallthru
      _
    // Predicated region
    $region18: #{tpu_custom_call.1} parent=1 // pred_check
      _
    $region19: #{tpu_custom_call.1} parent=1 // pred_check_branch
      %20 = sbr.rel (0) target = $region21
    $region20: #{tpu_custom_call.1} parent=1 // pred_region
      _
    $region21: #{tpu_custom_call.1} parent=1 // pred_fallthru
      _
    %v21 = vld [vmem:[%s0] sm:$0xff]
    %v22 = vld [vmem:[%s0 + $0x8] sm:$0xff]
    %v23 = vld [vmem:[%s0 + $0x10] sm:$0xff]
    %v24 = vld [vmem:[%s0 + $0x18] sm:$0xff]
    %v25 = vld [vmem:[%s0 + $0x20] sm:$0xff]
    %v26 = vld [vmem:[%s0 + $0x28] sm:$0xff]
    %v27 = vld [vmem:[%s0 + $0x30] sm:$0xff]
    %v28 = vld [vmem:[%s0 + $0x38] sm:$0xff]
    %v29 = vld [vmem:[%s1] sm:$0xff]
    %v30 = vld [vmem:[%s1 + $0x8] sm:$0x3]
    %v31 = vld [vmem:[%s2] sm:$0x1]
    %v33 = vlaneseq
    %v34 = vshrl.u32 %v33, 7
    %v35 = vsub.s32 0, %v34
    %v36 = vrot.slane %v31, %v35
    %vm38 = vcmask 80896
    %v40 = vsel %vm38, %v21, 0
    %v43 = vsel %vm38, %v22, 0
    %v46 = vsel %vm38, %v23, 0
    %v49 = vsel %vm38, %v24, 0
    %v52 = vsel %vm38, %v25, 0
    %v55 = vsel %vm38, %v26, 0
    %v58 = vsel %vm38, %v27, 0
    %v61 = vsel %vm38, %v28, 0
    %vm63 = vcmask 1041408
    %v65 = vsel %vm63, %v30, 0
    %67 = vmatprep.subr.mxu0 0.0
    %68 = vmatpush1.msra.mxu0 0.0
    %69 = vmatprep.subr.mxu0 0.0
    %70 = vmatpush1.msra.mxu0 0.0
    %71 = vmatprep.subr.mxu0 0.0
    %72 = vmatpush1.msra.mxu0 0.0
    %73 = vmatprep.subr.mxu0 0.0
    %74 = vmatpush1.msra.mxu0 0.0
    %75 = vmatprep.subr.mxu0 0.0
    %76 = vmatpush1.msra.mxu0 0.0
    %77 = vmatprep.subr.mxu0 0.0
    %78 = vmatpush1.msra.mxu0 0.0
    %79 = vmatprep.subr.mxu0 0.0
    %80 = vmatpush1.msra.mxu0 0.0
    %81 = vmatprep.subr.mxu0 0.0
    %82 = vmatpush1.msra.mxu0 0.0
    %83 = vmatprep.subr.mxu0 0.0
    %84 = vmatpush1.msra.mxu0 0.0
    %85 = vmatprep.subr.mxu0 0.0
    %86 = vmatpush1.msra.mxu0 0.0
    %87 = vmatprep.subr.mxu0 0.0
    %88 = vmatpush1.msra.mxu0 0.0
    %89 = vmatprep.subr.mxu0 0.0
    %90 = vmatpush1.msra.mxu0 0.0
    %91 = vmatprep.subr.mxu0 0.0
    %92 = vmatpush1.msra.mxu0 0.0
    %93 = vmatprep.subr.mxu0 0.0
    %94 = vmatpush1.msra.mxu0 0.0
    %95 = vmatprep.subr.mxu0 0.0
    %96 = vmatpush1.msra.mxu0 %v65
    %97 = vmatprep.subr.mxu0 0.0
    %98 = vmatpush1.msra.mxu0 %v29
    %99 = vmatprep.subr.mxu0 0.0
    %100 = vmatpush2.msra.mxu0 0.0
    %101 = vmatprep.subr.mxu0 0.0
    %102 = vmatpush2.msra.mxu0 0.0
    %103 = vmatprep.subr.mxu0 0.0
    %104 = vmatpush2.msra.mxu0 0.0
    %105 = vmatprep.subr.mxu0 0.0
    %106 = vmatpush2.msra.mxu0 0.0
    %107 = vmatprep.subr.mxu0 0.0
    %108 = vmatpush2.msra.mxu0 0.0
    %109 = vmatprep.subr.mxu0 0.0
    %110 = vmatpush2.msra.mxu0 0.0
    %111 = vmatprep.subr.mxu0 0.0
    %112 = vmatpush2.msra.mxu0 0.0
    %113 = vmatprep.subr.mxu0 0.0
    %114 = vmatpush2.msra.mxu0 0.0
    %115 = vmatprep.subr.mxu0 0.0
    %116 = vmatpush2.msra.mxu0 0.0
    %117 = vmatprep.subr.mxu0 0.0
    %118 = vmatpush2.msra.mxu0 0.0
    %119 = vmatprep.subr.mxu0 0.0
    %120 = vmatpush2.msra.mxu0 0.0
    %121 = vmatprep.subr.mxu0 0.0
    %122 = vmatpush2.msra.mxu0 0.0
    %123 = vmatprep.subr.mxu0 0.0
    %124 = vmatpush2.msra.mxu0 0.0
    %125 = vmatprep.subr.mxu0 0.0
    %126 = vmatpush2.msra.mxu0 0.0
    %127 = vmatprep.subr.mxu0 0.0
    %128 = vmatpush2.msra.mxu0 0.0
    %129 = vmatprep.subr.mxu0 0.0
    %130 = vmatpush2.msra.mxu0 0.0
    %131 = vmatprep.mubr.f32.mxu0 0.0
    %132 = vmatmul.mubr.f32.gmra.mxu0 %v40
    %v133 = vpop.f32.mrf.mxu0
    %v134 = vadd.f32 %v36, %v133
    %v135 = vpop.f32.mrf.mxu0
    %136 = vmatprep.mubr.f32.mxu0 0.0
    %137 = vmatmul.mubr.f32.gmra.mxu0 %v43
    %v138 = vpop.f32.mrf.mxu0
    %v139 = vadd.f32 %v36, %v138
    %v140 = vpop.f32.mrf.mxu0
    %141 = vmatprep.mubr.f32.mxu0 0.0
    %142 = vmatmul.mubr.f32.gmra.mxu0 %v46
    %v143 = vpop.f32.mrf.mxu0
    %v144 = vadd.f32 %v36, %v143
    %v145 = vpop.f32.mrf.mxu0
    %146 = vmatprep.mubr.f32.mxu0 0.0
    %147 = vmatmul.mubr.f32.gmra.mxu0 %v49
    %v148 = vpop.f32.mrf.mxu0
    %v149 = vadd.f32 %v36, %v148
    %v150 = vpop.f32.mrf.mxu0
    %151 = vmatprep.mubr.f32.mxu0 0.0
    %152 = vmatmul.mubr.f32.gmra.mxu0 %v52
    %v153 = vpop.f32.mrf.mxu0
    %v154 = vadd.f32 %v36, %v153
    %v155 = vpop.f32.mrf.mxu0
    %156 = vmatprep.mubr.f32.mxu0 0.0
    %157 = vmatmul.mubr.f32.gmra.mxu0 %v55
    %v158 = vpop.f32.mrf.mxu0
    %v159 = vadd.f32 %v36, %v158
    %v160 = vpop.f32.mrf.mxu0
    %161 = vmatprep.mubr.f32.mxu0 0.0
    %162 = vmatmul.mubr.f32.gmra.mxu0 %v58
    %v163 = vpop.f32.mrf.mxu0
    %v164 = vadd.f32 %v36, %v163
    %v165 = vpop.f32.mrf.mxu0
    %166 = vmatprep.mubr.f32.mxu0 0.0
    %167 = vmatmul.mubr.f32.gmra.mxu0 %v61
    %v168 = vpop.f32.mrf.mxu0
    %v169 = vadd.f32 %v36, %v168
    %v170 = vpop.f32.mrf.mxu0
    %171 = vdwg.mxu0
    %v172 = vmax.f32 %v134, 0.0
    %v173 = vmax.f32 %v139, 0.0
    %v174 = vmax.f32 %v144, 0.0
    %v175 = vmax.f32 %v149, 0.0
    %v176 = vmax.f32 %v154, 0.0
    %v177 = vmax.f32 %v159, 0.0
    %v178 = vmax.f32 %v164, 0.0
    %v179 = vmax.f32 %v169, 0.0
    %v180 = vld [vmem:[%s3] sm:$0xff]
    %v181 = vld [vmem:[%s3 + $0x8] sm:$0xff]
    %v182 = vld [vmem:[%s3 + $0x10] sm:$0xff]
    %v183 = vld [vmem:[%s3 + $0x18] sm:$0xff]
    %v184 = vld [vmem:[%s3 + $0x20] sm:$0xff]
    %v185 = vld [vmem:[%s3 + $0x28] sm:$0xff]
    %v186 = vld [vmem:[%s3 + $0x30] sm:$0x3]
    %v187 = vld [vmem:[%s4] sm:$0x1]
    %v189 = vlaneseq
    %v190 = vshrl.u32 %v189, 7
    %v191 = vsub.s32 0, %v190
    %v192 = vrot.slane %v187, %v191
    %vm194 = vcmask 408576
    %v196 = vsel %vm194, %v172, 0
    %v199 = vsel %vm194, %v173, 0
    %v202 = vsel %vm194, %v174, 0
    %v205 = vsel %vm194, %v175, 0
    %v208 = vsel %vm194, %v176, 0
    %v211 = vsel %vm194, %v177, 0
    %v214 = vsel %vm194, %v178, 0
    %v217 = vsel %vm194, %v179, 0
    %v220 = vsel %vm63, %v186, 0
    %222 = vmatprep.subr.mxu0 0.0
    %223 = vmatpush1.msra.mxu0 0.0
    %224 = vmatprep.subr.mxu0 0.0
    %225 = vmatpush1.msra.mxu0 0.0
    %226 = vmatprep.subr.mxu0 0.0
    %227 = vmatpush1.msra.mxu0 0.0
    %228 = vmatprep.subr.mxu0 0.0
    %229 = vmatpush1.msra.mxu0 0.0
    %230 = vmatprep.subr.mxu0 0.0
    %231 = vmatpush1.msra.mxu0 0.0
    %232 = vmatprep.subr.mxu0 0.0
    %233 = vmatpush1.msra.mxu0 0.0
    %234 = vmatprep.subr.mxu0 0.0
    %235 = vmatpush1.msra.mxu0 0.0
    %236 = vmatprep.subr.mxu0 0.0
    %237 = vmatpush1.msra.mxu0 0.0
    %238 = vmatprep.subr.mxu0 0.0
    %239 = vmatpush1.msra.mxu0 0.0
    %240 = vmatprep.subr.mxu0 0.0
    %241 = vmatpush1.msra.mxu0 %v220
    %242 = vmatprep.subr.mxu0 0.0
    %243 = vmatpush1.msra.mxu0 %v185
    %244 = vmatprep.subr.mxu0 0.0
    %245 = vmatpush1.msra.mxu0 %v184
    %246 = vmatprep.subr.mxu0 0.0
    %247 = vmatpush1.msra.mxu0 %v183
    %248 = vmatprep.subr.mxu0 0.0
    %249 = vmatpush1.msra.mxu0 %v182
    %250 = vmatprep.subr.mxu0 0.0
    %251 = vmatpush1.msra.mxu0 %v181
    %252 = vmatprep.subr.mxu0 0.0
    %253 = vmatpush1.msra.mxu0 %v180
    %254 = vmatprep.subr.mxu0 0.0
    %255 = vmatpush2.msra.mxu0 0.0
    %256 = vmatprep.subr.mxu0 0.0
    %257 = vmatpush2.msra.mxu0 0.0
    %258 = vmatprep.subr.mxu0 0.0
    %259 = vmatpush2.msra.mxu0 0.0
    %260 = vmatprep.subr.mxu0 0.0
    %261 = vmatpush2.msra.mxu0 0.0
    %262 = vmatprep.subr.mxu0 0.0
    %263 = vmatpush2.msra.mxu0 0.0
    %264 = vmatprep.subr.mxu0 0.0
    %265 = vmatpush2.msra.mxu0 0.0
    %266 = vmatprep.subr.mxu0 0.0
    %267 = vmatpush2.msra.mxu0 0.0
    %268 = vmatprep.subr.mxu0 0.0
    %269 = vmatpush2.msra.mxu0 0.0
    %270 = vmatprep.subr.mxu0 0.0
    %271 = vmatpush2.msra.mxu0 0.0
    %272 = vmatprep.subr.mxu0 0.0
    %273 = vmatpush2.msra.mxu0 0.0
    %274 = vmatprep.subr.mxu0 0.0
    %275 = vmatpush2.msra.mxu0 0.0
    %276 = vmatprep.subr.mxu0 0.0
    %277 = vmatpush2.msra.mxu0 0.0
    %278 = vmatprep.subr.mxu0 0.0
    %279 = vmatpush2.msra.mxu0 0.0
    %280 = vmatprep.subr.mxu0 0.0
    %281 = vmatpush2.msra.mxu0 0.0
    %282 = vmatprep.subr.mxu0 0.0
    %283 = vmatpush2.msra.mxu0 0.0
    %284 = vmatprep.subr.mxu0 0.0
    %285 = vmatpush2.msra.mxu0 0.0
    %286 = vmatprep.mubr.f32.mxu0 0.0
    %287 = vmatmul.mubr.f32.gmra.mxu0 %v196
    %v288 = vpop.f32.mrf.mxu0
    %v289 = vadd.f32 %v192, %v288
    %v290 = vpop.f32.mrf.mxu0
    %291 = vmatprep.mubr.f32.mxu0 0.0
    %292 = vmatmul.mubr.f32.gmra.mxu0 %v199
    %v293 = vpop.f32.mrf.mxu0
    %v294 = vadd.f32 %v192, %v293
    %v295 = vpop.f32.mrf.mxu0
    %296 = vmatprep.mubr.f32.mxu0 0.0
    %297 = vmatmul.mubr.f32.gmra.mxu0 %v202
    %v298 = vpop.f32.mrf.mxu0
    %v299 = vadd.f32 %v192, %v298
    %v300 = vpop.f32.mrf.mxu0
    %301 = vmatprep.mubr.f32.mxu0 0.0
    %302 = vmatmul.mubr.f32.gmra.mxu0 %v205
    %v303 = vpop.f32.mrf.mxu0
    %v304 = vadd.f32 %v192, %v303
    %v305 = vpop.f32.mrf.mxu0
    %306 = vmatprep.mubr.f32.mxu0 0.0
    %307 = vmatmul.mubr.f32.gmra.mxu0 %v208
    %v308 = vpop.f32.mrf.mxu0
    %v309 = vadd.f32 %v192, %v308
    %v310 = vpop.f32.mrf.mxu0
    %311 = vmatprep.mubr.f32.mxu0 0.0
    %312 = vmatmul.mubr.f32.gmra.mxu0 %v211
    %v313 = vpop.f32.mrf.mxu0
    %v314 = vadd.f32 %v192, %v313
    %v315 = vpop.f32.mrf.mxu0
    %316 = vmatprep.mubr.f32.mxu0 0.0
    %317 = vmatmul.mubr.f32.gmra.mxu0 %v214
    %v318 = vpop.f32.mrf.mxu0
    %v319 = vadd.f32 %v192, %v318
    %v320 = vpop.f32.mrf.mxu0
    %321 = vmatprep.mubr.f32.mxu0 0.0
    %322 = vmatmul.mubr.f32.gmra.mxu0 %v217
    %v323 = vpop.f32.mrf.mxu0
    %v324 = vadd.f32 %v192, %v323
    %v325 = vpop.f32.mrf.mxu0
    %326 = vdwg.mxu0
    %v327 = vxor.u32 %v289, 2147483648
    %v328 = vxor.u32 %v294, 2147483648
    %v329 = vxor.u32 %v299, 2147483648
    %v330 = vxor.u32 %v304, 2147483648
    %v331 = vxor.u32 %v309, 2147483648
    %v332 = vxor.u32 %v314, 2147483648
    %v333 = vxor.u32 %v319, 2147483648
    %v334 = vxor.u32 %v324, 2147483648
    %v335 = vmul.f32 %v327, 1.442695
    %v336 = vpow.pop %v335
    %v337 = vmul.f32 %v328, 1.442695
    %v338 = vpow.pop %v337
    %v339 = vmul.f32 %v329, 1.442695
    %v340 = vpow.pop %v339
    %v341 = vmul.f32 %v330, 1.442695
    %v342 = vpow.pop %v341
    %v343 = vmul.f32 %v331, 1.442695
    %v344 = vpow.pop %v343
    %v345 = vmul.f32 %v332, 1.442695
    %v346 = vpow.pop %v345
    %v347 = vmul.f32 %v333, 1.442695
    %v348 = vpow.pop %v347
    %v349 = vmul.f32 %v334, 1.442695
    %v350 = vpow.pop %v349
    %v351 = vadd.f32 %v336, 1.0
    %v352 = vadd.f32 %v338, 1.0
    %v353 = vadd.f32 %v340, 1.0
    %v354 = vadd.f32 %v342, 1.0
    %v355 = vadd.f32 %v344, 1.0
    %v356 = vadd.f32 %v346, 1.0
    %v357 = vadd.f32 %v348, 1.0
    %v358 = vadd.f32 %v350, 1.0
    %v359 = vrcp.pop %v351
    %v360 = vmul.f32 1.0, %v359
    %v361 = vrcp.pop %v352
    %v362 = vmul.f32 1.0, %v361
    %v363 = vrcp.pop %v353
    %v364 = vmul.f32 1.0, %v363
    %v365 = vrcp.pop %v354
    %v366 = vmul.f32 1.0, %v365
    %v367 = vrcp.pop %v355
    %v368 = vmul.f32 1.0, %v367
    %v369 = vrcp.pop %v356
    %v370 = vmul.f32 1.0, %v369
    %v371 = vrcp.pop %v357
    %v372 = vmul.f32 1.0, %v371
    %v373 = vrcp.pop %v358
    %v374 = vmul.f32 1.0, %v373
    %vm375 = vcmask 523264
    %376 = vst.msk [vmem:[#allocation2] sm:$0xff] %vm375, %v360
    %377 = vst.msk [vmem:[#allocation2 + $0x8] sm:$0xff] %vm375, %v362
    %378 = vst.msk [vmem:[#allocation2 + $0x10] sm:$0xff] %vm375, %v364
    %379 = vst.msk [vmem:[#allocation2 + $0x18] sm:$0xff] %vm375, %v366
    %380 = vst.msk [vmem:[#allocation2 + $0x20] sm:$0xff] %vm375, %v368
    %381 = vst.msk [vmem:[#allocation2 + $0x28] sm:$0xff] %vm375, %v370
    %382 = vst.msk [vmem:[#allocation2 + $0x30] sm:$0xff] %vm375, %v372
    %383 = vst.msk [vmem:[#allocation2 + $0x38] sm:$0xff] %vm375, %v374
    // Predicated region
    $region22: #{tpu_custom_call.1} parent=1 // pred_check
      _
    $region23: #{tpu_custom_call.1} parent=1 // pred_check_branch
      %385 = sbr.rel (0) target = $region25
    $region24: #{tpu_custom_call.1} parent=1 // pred_region
      %s387 = ssub.s32 1024, 1024
      %388 = vsyncadd [#allocation3], %s387
      %s389 = sshll.u32 [#allocation2], 4
      %s390 = int_to_ptr.vmem [resolvable:$true] %s389
      %395 = dma.vmem_to_hbm [thread:$0]  %s390, 1024, %s5, [#allocation3], 128, 128, 8
    $region25: #{tpu_custom_call.1} parent=1 // pred_fallthru
      _
    // Predicated region
    $region26: #{tpu_custom_call.1} parent=1 // pred_check
      _
    $region27: #{tpu_custom_call.1} parent=1 // pred_check_branch
      %397 = sbr.rel (0) target = $region29
    $region28: #{tpu_custom_call.1} parent=1 // pred_region
      %398 = dma.done [#allocation3], 1024
    $region29: #{tpu_custom_call.1} parent=1 // pred_fallthru
      _
    %399 = vsyncpa [#allocation3], 1

</llo_original>
